<compile_context>
chip_gen: v5e
topology: v5e:2x2
jax: 0.10.0
libtpu: 0.0.40
codegen_flags: <defaults>
</compile_context>

<pallas_src>
import jax
import jax.numpy as jnp
import numpy as np
from jax import lax
from jax.experimental import pallas as pl
from jax.experimental.pallas import tpu as pltpu

# Shapes chosen so every channel group is a multiple of the 8-sublane tile and the
# flattened N*H*W axis is a multiple of 256.  inplanes == planes*expansion so the
# identity residual path (downsample=None) is valid.
N, H, W = 2, 16, 16
PLANES = 8
EXPANSION = 4
C_OUT = PLANES * EXPANSION        # 32
C_IN = C_OUT                      # 32 -> identity residual is valid
NHW = N * H * W                   # 512 lanes (4 lane tiles, 2x the 256-wide MXU)
K2 = 9 * PLANES                   # 72: contraction size of the fused 3x3 conv matmul
EPS = 1e-5

# ---- packed parameter slab layout: one (P_ROWS, 128) f32 array ----
P_COLS = 128
# row group 0 (rows 0:PLANES): conv1 / conv2 weights + bn1 / bn2 affine params
W1_COL = 0                        # (PLANES, C_IN)   cols 0:32
W2_COL = W1_COL + C_IN            # (PLANES, K2)     cols 32:104
G1_COL = W2_COL + K2              # 104 (PLANES, 1) columns
B1_COL = G1_COL + 1
G2_COL = G1_COL + 2
B2_COL = G1_COL + 3
# row group 1 (rows PLANES:PLANES+C_OUT): conv3 weight + bn3 affine params
W3_ROW = PLANES                   # 8
W3_COL = 0                        # (C_OUT, PLANES)  cols 0:8
G3_COL = PLANES                   # col 8
B3_COL = PLANES + 1               # col 9
P_ROWS = PLANES + C_OUT           # 40


def bottleneck_kernel(x_ref, p_ref, m_ref, o_ref):
    x = x_ref[...]                                                  # (C_IN, NHW)

    # Constant ones RHS: BN lane reductions run as matmuls on the otherwise-idle MXU
    # instead of log2(NHW) XLU rotate+add chains; N=128 is the native MXU lane width.
    ones_rhs = jnp.ones((NHW, 128), jnp.float32)
    inv_n = 1.0 / NHW

    def bn(z, gamma, beta, relu):
        # Training-mode BatchNorm2d: per-channel stats over the N*H*W lane axis.
        c = z.shape[0]
        zz = jnp.concatenate([z, z * z], axis=0)                    # (2c, NHW)
        s = jnp.dot(zz, ones_rhs,
                    preferred_element_type=jnp.float32)[:, 0:1] * inv_n
        mu, m2 = s[:c, :], s[c:, :]                                 # (c, 1) each
        # one-pass variance, clamped at 0 (documented: fine at the 1e-2 tolerance)
        var = jnp.maximum(m2 - mu * mu, 0.0)
        scale = gamma * lax.rsqrt(var + EPS)                        # narrow (c,1) math
        shift = beta - mu * scale
        y = z * scale + shift                                       # 2 lane-broadcasts
        return jnp.maximum(y, 0.0) if relu else y

    # ---- conv1: 1x1 conv == channel matmul on the MXU ----
    w1 = p_ref[0:PLANES, W1_COL:W1_COL + C_IN]                      # (PLANES, C_IN)
    h = jnp.dot(w1, x, preferred_element_type=jnp.float32)          # (PLANES, NHW)
    h = bn(h, p_ref[0:PLANES, G1_COL:G1_COL + 1],
           p_ref[0:PLANES, B1_COL:B1_COL + 1], relu=True)

    # ---- conv2: 3x3, stride 1, pad 1 == ONE fused K=72 MXU matmul ----
    # Build the im2col operand in vregs: 9 tap-major lane-rolled copies, each a full
    # (8, NHW) sublane tile, boundary-masked by a (1, NHW) position mask row.
    chunks = []
    for t in range(9):
        dy, dx = t // 3 - 1, t % 3 - 1
        off = dy * W + dx
        if off == 0:
            chunks.append(h)                                        # center tap: all valid
        else:
            rolled = pltpu.roll(h, shift=(-off) % NHW, axis=1)
            chunks.append(rolled * m_ref[t:t + 1, :])               # sublane-bcast mask
    stacked = jnp.concatenate(chunks, axis=0)                       # (K2, NHW) in vregs
    w2 = p_ref[0:PLANES, W2_COL:W2_COL + K2]                        # (PLANES, K2)
    h = jnp.dot(w2, stacked, preferred_element_type=jnp.float32)    # (PLANES, NHW)
    h = bn(h, p_ref[0:PLANES, G2_COL:G2_COL + 1],
           p_ref[0:PLANES, B2_COL:B2_COL + 1], relu=True)

    # ---- conv3: 1x1 expansion, BN, identity residual add, final ReLU ----
    w3 = p_ref[W3_ROW:W3_ROW + C_OUT, W3_COL:W3_COL + PLANES]       # (C_OUT, PLANES)
    h = jnp.dot(w3, h, preferred_element_type=jnp.float32)          # (C_OUT, NHW)
    h = bn(h, p_ref[W3_ROW:W3_ROW + C_OUT, G3_COL:G3_COL + 1],
           p_ref[W3_ROW:W3_ROW + C_OUT, B3_COL:B3_COL + 1], relu=False)
    o_ref[...] = jnp.maximum(h + x, 0.0)


def init_params(key):
    ks = jax.random.split(key, 9)
    return {
        # PyTorch conv weights, OIHW
        "w1": jax.random.normal(ks[0], (PLANES, C_IN, 1, 1), jnp.float32) * 0.2,
        "w2": jax.random.normal(ks[1], (PLANES, PLANES, 3, 3), jnp.float32) * 0.2,
        "w3": jax.random.normal(ks[2], (C_OUT, PLANES, 1, 1), jnp.float32) * 0.2,
        # BatchNorm affine params (deterministic, non-trivial)
        "g1": 1.0 + 0.1 * jax.random.normal(ks[3], (PLANES,), jnp.float32),
        "b1": 0.1 * jax.random.normal(ks[4], (PLANES,), jnp.float32),
        "g2": 1.0 + 0.1 * jax.random.normal(ks[5], (PLANES,), jnp.float32),
        "b2": 0.1 * jax.random.normal(ks[6], (PLANES,), jnp.float32),
        "g3": 1.0 + 0.1 * jax.random.normal(ks[7], (C_OUT,), jnp.float32),
        "b3": 0.1 * jax.random.normal(ks[8], (C_OUT,), jnp.float32),
    }


def pack_params(p):
    """Pack all conv/BN parameters into a single sublane-aligned (40,128) slab."""
    w1 = p["w1"][:, :, 0, 0]                                        # (PLANES, C_IN)
    w3 = p["w3"][:, :, 0, 0]                                        # (C_OUT, PLANES)
    # (o, tap*PLANES + i) with tap = ky*3 + kx, matching the kernel's stacking order.
    w2 = jnp.transpose(p["w2"], (2, 3, 1, 0)).reshape(K2, PLANES).T  # (PLANES, K2)
    slab = jnp.zeros((P_ROWS, P_COLS), jnp.float32)
    slab = slab.at[0:PLANES, W1_COL:W1_COL + C_IN].set(w1)
    slab = slab.at[0:PLANES, W2_COL:W2_COL + K2].set(w2)
    slab = slab.at[0:PLANES, G1_COL].set(p["g1"])
    slab = slab.at[0:PLANES, B1_COL].set(p["b1"])
    slab = slab.at[0:PLANES, G2_COL].set(p["g2"])
    slab = slab.at[0:PLANES, B2_COL].set(p["b2"])
    slab = slab.at[W3_ROW:W3_ROW + C_OUT, W3_COL:W3_COL + PLANES].set(w3)
    slab = slab.at[W3_ROW:W3_ROW + C_OUT, G3_COL].set(p["g3"])
    slab = slab.at[W3_ROW:W3_ROW + C_OUT, B3_COL].set(p["b3"])
    return slab


def make_mask_slab():
    """Precompute the 9 boundary-validity masks as a (9, NHW) position-only slab."""
    col = np.arange(NHW)
    yy = (col % (H * W)) // W
    xx = col % W
    rows = []
    for t in range(9):
        dy, dx = t // 3 - 1, t % 3 - 1
        valid = ((yy + dy >= 0) & (yy + dy < H) & (xx + dx >= 0) & (xx + dx < W))
        rows.append(valid.astype(np.float32))
    return jnp.asarray(np.stack(rows, axis=0))                      # (9, NHW)


@jax.jit
def bottleneck_forward(x_nchw, pslab, masks):
    x_flat = jnp.transpose(x_nchw, (1, 0, 2, 3)).reshape(C_IN, NHW)
    vmem = pl.BlockSpec(memory_space=pltpu.MemorySpace.VMEM)
    conv_flops = 2 * NHW * (PLANES * C_IN + PLANES * K2 + C_OUT * PLANES)
    bn_flops = 2 * NHW * 128 * (2 * PLANES + 2 * PLANES + 2 * C_OUT)
    bytes_accessed = 4 * (C_IN * NHW + P_ROWS * P_COLS + 9 * NHW + C_OUT * NHW)
    out_flat = pl.pallas_call(
        bottleneck_kernel,
        out_shape=jax.ShapeDtypeStruct((C_OUT, NHW), jnp.float32),
        in_specs=[vmem, vmem, vmem],
        out_specs=vmem,
        compiler_params=pltpu.CompilerParams(vmem_limit_bytes=32 * 1024 * 1024),
        cost_estimate=pl.CostEstimate(
            flops=conv_flops + bn_flops,
            transcendentals=2 * PLANES + C_OUT,
            bytes_accessed=bytes_accessed),
    )(x_flat, pslab, masks)
    return jnp.transpose(out_flat.reshape(C_OUT, N, H, W), (1, 0, 2, 3))


def ref_bottleneck(x, p):
    # Pure-JAX reference (NCHW), mirrors the PyTorch forward in training mode.
    def conv(h, w, pad=0):
        return lax.conv_general_dilated(
            h, w, (1, 1), [(pad, pad), (pad, pad)],
            dimension_numbers=("NCHW", "OIHW", "NCHW"))

    def bn(z, g, b):
        mu = jnp.mean(z, axis=(0, 2, 3), keepdims=True)
        var = jnp.mean((z - mu) ** 2, axis=(0, 2, 3), keepdims=True)
        return (z - mu) / jnp.sqrt(var + EPS) * g.reshape(1, -1, 1, 1) + b.reshape(1, -1, 1, 1)

    h = jax.nn.relu(bn(conv(x, p["w1"]), p["g1"], p["b1"]))
    h = jax.nn.relu(bn(conv(h, p["w2"], pad=1), p["g2"], p["b2"]))
    h = bn(conv(h, p["w3"]), p["g3"], p["b3"])
    return jax.nn.relu(h + x)


if __name__ == "__main__":
    key = jax.random.PRNGKey(0)
    kx, kp = jax.random.split(key)
    x = jax.random.normal(kx, (N, C_IN, H, W), jnp.float32)
    params = init_params(kp)

    pslab = pack_params(params)
    masks = make_mask_slab()

    out = jax.block_until_ready(bottleneck_forward(x, pslab, masks))
    ref = jax.block_until_ready(ref_bottleneck(x, params))
    max_err = float(jnp.max(jnp.abs(out - ref)))
    assert out.shape == (N, C_OUT, H, W), out.shape
    assert max_err < 1e-2, f"mismatch vs reference: {max_err}"
    print("KERNEL_OK")
</pallas_src>

<mosaic_0001>
module attributes {stable_mosaic.version = 11 : i64} {
  func.func @bottleneck_kernel(%arg0: memref<32x512xf32, #tpu.memory_space<vmem>>, %arg1: memref<40x128xf32, #tpu.memory_space<vmem>>, %arg2: memref<9x512xf32, #tpu.memory_space<vmem>>, %arg3: memref<32x512xf32, #tpu.memory_space<vmem>>) attributes {dimension_semantics = [], scalar_prefetch = 0 : i64, scratch_operands = 0 : i64, tpu.core_type = #tpu.core_type<tc>} {
    %c0 = arith.constant 0 : index
    %c0_0 = arith.constant 0 : index
    %0 = vector.load %arg0[%c0, %c0_0] : memref<32x512xf32, #tpu.memory_space<vmem>>, vector<32x512xf32>
    %cst = arith.constant 1.000000e+00 : f32
    %1 = vector.broadcast %cst : f32 to vector<512x128xf32>
    %c0_1 = arith.constant 0 : index
    %c0_2 = arith.constant 0 : index
    %2 = vector.load %arg1[%c0_1, %c0_2] : memref<40x128xf32, #tpu.memory_space<vmem>>, vector<8x32xf32>
    %cst_3 = arith.constant dense<0.000000e+00> : vector<8x512xf32>
    %3 = tpu.matmul %2, %0, %cst_3 {dimension_numbers = #tpu.dot_dimension_numbers<[1], [0], [0], [1], [0, 0, 1, 1], [], []>} : vector<8x32xf32>, vector<32x512xf32>, vector<8x512xf32> -> vector<8x512xf32>
    %c0_4 = arith.constant 0 : index
    %c104 = arith.constant 104 : index
    %4 = vector.load %arg1[%c0_4, %c104] : memref<40x128xf32, #tpu.memory_space<vmem>>, vector<8x1xf32>
    %c0_5 = arith.constant 0 : index
    %c105 = arith.constant 105 : index
    %5 = vector.load %arg1[%c0_5, %c105] : memref<40x128xf32, #tpu.memory_space<vmem>>, vector<8x1xf32>
    %6 = arith.mulf %3, %3 : vector<8x512xf32>
    %7 = tpu.concatenate %3, %6 in 0 : vector<8x512xf32>, vector<8x512xf32> -> vector<16x512xf32>
    %cst_6 = arith.constant dense<0.000000e+00> : vector<16x128xf32>
    %8 = tpu.matmul %7, %1, %cst_6 {dimension_numbers = #tpu.dot_dimension_numbers<[1], [0], [0], [1], [0, 0, 1, 1], [], []>} : vector<16x512xf32>, vector<512x128xf32>, vector<16x128xf32> -> vector<16x128xf32>
    %9 = vector.extract_strided_slice %8 {offsets = [0, 0], sizes = [16, 1], strides = [1, 1]} : vector<16x128xf32> to vector<16x1xf32>
    %cst_7 = arith.constant 0.001953125 : f32
    %10 = vector.broadcast %cst_7 : f32 to vector<16x1xf32>
    %11 = arith.mulf %9, %10 : vector<16x1xf32>
    %12 = vector.extract_strided_slice %11 {offsets = [0, 0], sizes = [8, 1], strides = [1, 1]} : vector<16x1xf32> to vector<8x1xf32>
    %13 = vector.extract_strided_slice %11 {offsets = [8, 0], sizes = [8, 1], strides = [1, 1]} : vector<16x1xf32> to vector<8x1xf32>
    %14 = arith.mulf %12, %12 : vector<8x1xf32>
    %15 = arith.subf %13, %14 : vector<8x1xf32>
    %cst_8 = arith.constant 0.000000e+00 : f32
    %16 = vector.broadcast %cst_8 : f32 to vector<8x1xf32>
    %17 = arith.maximumf %15, %16 : vector<8x1xf32>
    %cst_9 = arith.constant 9.99999974E-6 : f32
    %18 = vector.broadcast %cst_9 : f32 to vector<8x1xf32>
    %19 = arith.addf %17, %18 : vector<8x1xf32>
    %20 = math.rsqrt %19 : vector<8x1xf32>
    %21 = arith.mulf %4, %20 : vector<8x1xf32>
    %22 = arith.mulf %12, %21 : vector<8x1xf32>
    %23 = arith.subf %5, %22 : vector<8x1xf32>
    %24 = vector.broadcast %21 : vector<8x1xf32> to vector<8x512xf32>
    %25 = arith.mulf %3, %24 : vector<8x512xf32>
    %26 = vector.broadcast %23 : vector<8x1xf32> to vector<8x512xf32>
    %27 = arith.addf %25, %26 : vector<8x512xf32>
    %cst_10 = arith.constant 0.000000e+00 : f32
    %28 = vector.broadcast %cst_10 : f32 to vector<8x512xf32>
    %29 = arith.maximumf %27, %28 : vector<8x512xf32>
    %c17_i32 = arith.constant 17 : i32
    %30 = tpu.dynamic_rotate %29 by %c17_i32 dim 1 : vector<8x512xf32>, i32 -> vector<8x512xf32>
    %c0_11 = arith.constant 0 : index
    %c0_12 = arith.constant 0 : index
    %31 = vector.load %arg2[%c0_11, %c0_12] : memref<9x512xf32, #tpu.memory_space<vmem>>, vector<1x512xf32>
    %32 = vector.broadcast %31 : vector<1x512xf32> to vector<8x512xf32>
    %33 = arith.mulf %30, %32 : vector<8x512xf32>
    %c16_i32 = arith.constant 16 : i32
    %34 = tpu.dynamic_rotate %29 by %c16_i32 dim 1 : vector<8x512xf32>, i32 -> vector<8x512xf32>
    %c1 = arith.constant 1 : index
    %c0_13 = arith.constant 0 : index
    %35 = vector.load %arg2[%c1, %c0_13] : memref<9x512xf32, #tpu.memory_space<vmem>>, vector<1x512xf32>
    %36 = vector.broadcast %35 : vector<1x512xf32> to vector<8x512xf32>
    %37 = arith.mulf %34, %36 : vector<8x512xf32>
    %c15_i32 = arith.constant 15 : i32
    %38 = tpu.dynamic_rotate %29 by %c15_i32 dim 1 : vector<8x512xf32>, i32 -> vector<8x512xf32>
    %c2 = arith.constant 2 : index
    %c0_14 = arith.constant 0 : index
    %39 = vector.load %arg2[%c2, %c0_14] : memref<9x512xf32, #tpu.memory_space<vmem>>, vector<1x512xf32>
    %40 = vector.broadcast %39 : vector<1x512xf32> to vector<8x512xf32>
    %41 = arith.mulf %38, %40 : vector<8x512xf32>
    %c1_i32 = arith.constant 1 : i32
    %42 = tpu.dynamic_rotate %29 by %c1_i32 dim 1 : vector<8x512xf32>, i32 -> vector<8x512xf32>
    %c3 = arith.constant 3 : index
    %c0_15 = arith.constant 0 : index
    %43 = vector.load %arg2[%c3, %c0_15] : memref<9x512xf32, #tpu.memory_space<vmem>>, vector<1x512xf32>
    %44 = vector.broadcast %43 : vector<1x512xf32> to vector<8x512xf32>
    %45 = arith.mulf %42, %44 : vector<8x512xf32>
    %c511_i32 = arith.constant 511 : i32
    %46 = tpu.dynamic_rotate %29 by %c511_i32 dim 1 : vector<8x512xf32>, i32 -> vector<8x512xf32>
    %c5 = arith.constant 5 : index
    %c0_16 = arith.constant 0 : index
    %47 = vector.load %arg2[%c5, %c0_16] : memref<9x512xf32, #tpu.memory_space<vmem>>, vector<1x512xf32>
    %48 = vector.broadcast %47 : vector<1x512xf32> to vector<8x512xf32>
    %49 = arith.mulf %46, %48 : vector<8x512xf32>
    %c497_i32 = arith.constant 497 : i32
    %50 = tpu.dynamic_rotate %29 by %c497_i32 dim 1 : vector<8x512xf32>, i32 -> vector<8x512xf32>
    %c6 = arith.constant 6 : index
    %c0_17 = arith.constant 0 : index
    %51 = vector.load %arg2[%c6, %c0_17] : memref<9x512xf32, #tpu.memory_space<vmem>>, vector<1x512xf32>
    %52 = vector.broadcast %51 : vector<1x512xf32> to vector<8x512xf32>
    %53 = arith.mulf %50, %52 : vector<8x512xf32>
    %c496_i32 = arith.constant 496 : i32
    %54 = tpu.dynamic_rotate %29 by %c496_i32 dim 1 : vector<8x512xf32>, i32 -> vector<8x512xf32>
    %c7 = arith.constant 7 : index
    %c0_18 = arith.constant 0 : index
    %55 = vector.load %arg2[%c7, %c0_18] : memref<9x512xf32, #tpu.memory_space<vmem>>, vector<1x512xf32>
    %56 = vector.broadcast %55 : vector<1x512xf32> to vector<8x512xf32>
    %57 = arith.mulf %54, %56 : vector<8x512xf32>
    %c495_i32 = arith.constant 495 : i32
    %58 = tpu.dynamic_rotate %29 by %c495_i32 dim 1 : vector<8x512xf32>, i32 -> vector<8x512xf32>
    %c8 = arith.constant 8 : index
    %c0_19 = arith.constant 0 : index
    %59 = vector.load %arg2[%c8, %c0_19] : memref<9x512xf32, #tpu.memory_space<vmem>>, vector<1x512xf32>
    %60 = vector.broadcast %59 : vector<1x512xf32> to vector<8x512xf32>
    %61 = arith.mulf %58, %60 : vector<8x512xf32>
    %62 = tpu.concatenate %33, %37, %41, %45, %29, %49, %53, %57, %61 in 0 : vector<8x512xf32>, vector<8x512xf32>, vector<8x512xf32>, vector<8x512xf32>, vector<8x512xf32>, vector<8x512xf32>, vector<8x512xf32>, vector<8x512xf32>, vector<8x512xf32> -> vector<72x512xf32>
    %c0_20 = arith.constant 0 : index
    %c32 = arith.constant 32 : index
    %63 = vector.load %arg1[%c0_20, %c32] : memref<40x128xf32, #tpu.memory_space<vmem>>, vector<8x72xf32>
    %cst_21 = arith.constant dense<0.000000e+00> : vector<8x512xf32>
    %64 = tpu.matmul %63, %62, %cst_21 {dimension_numbers = #tpu.dot_dimension_numbers<[1], [0], [0], [1], [0, 0, 1, 1], [], []>} : vector<8x72xf32>, vector<72x512xf32>, vector<8x512xf32> -> vector<8x512xf32>
    %c0_22 = arith.constant 0 : index
    %c106 = arith.constant 106 : index
    %65 = vector.load %arg1[%c0_22, %c106] : memref<40x128xf32, #tpu.memory_space<vmem>>, vector<8x1xf32>
    %c0_23 = arith.constant 0 : index
    %c107 = arith.constant 107 : index
    %66 = vector.load %arg1[%c0_23, %c107] : memref<40x128xf32, #tpu.memory_space<vmem>>, vector<8x1xf32>
    %67 = arith.mulf %64, %64 : vector<8x512xf32>
    %68 = tpu.concatenate %64, %67 in 0 : vector<8x512xf32>, vector<8x512xf32> -> vector<16x512xf32>
    %cst_24 = arith.constant dense<0.000000e+00> : vector<16x128xf32>
    %69 = tpu.matmul %68, %1, %cst_24 {dimension_numbers = #tpu.dot_dimension_numbers<[1], [0], [0], [1], [0, 0, 1, 1], [], []>} : vector<16x512xf32>, vector<512x128xf32>, vector<16x128xf32> -> vector<16x128xf32>
    %70 = vector.extract_strided_slice %69 {offsets = [0, 0], sizes = [16, 1], strides = [1, 1]} : vector<16x128xf32> to vector<16x1xf32>
    %cst_25 = arith.constant 0.001953125 : f32
    %71 = vector.broadcast %cst_25 : f32 to vector<16x1xf32>
    %72 = arith.mulf %70, %71 : vector<16x1xf32>
    %73 = vector.extract_strided_slice %72 {offsets = [0, 0], sizes = [8, 1], strides = [1, 1]} : vector<16x1xf32> to vector<8x1xf32>
    %74 = vector.extract_strided_slice %72 {offsets = [8, 0], sizes = [8, 1], strides = [1, 1]} : vector<16x1xf32> to vector<8x1xf32>
    %75 = arith.mulf %73, %73 : vector<8x1xf32>
    %76 = arith.subf %74, %75 : vector<8x1xf32>
    %cst_26 = arith.constant 0.000000e+00 : f32
    %77 = vector.broadcast %cst_26 : f32 to vector<8x1xf32>
    %78 = arith.maximumf %76, %77 : vector<8x1xf32>
    %cst_27 = arith.constant 9.99999974E-6 : f32
    %79 = vector.broadcast %cst_27 : f32 to vector<8x1xf32>
    %80 = arith.addf %78, %79 : vector<8x1xf32>
    %81 = math.rsqrt %80 : vector<8x1xf32>
    %82 = arith.mulf %65, %81 : vector<8x1xf32>
    %83 = arith.mulf %73, %82 : vector<8x1xf32>
    %84 = arith.subf %66, %83 : vector<8x1xf32>
    %85 = vector.broadcast %82 : vector<8x1xf32> to vector<8x512xf32>
    %86 = arith.mulf %64, %85 : vector<8x512xf32>
    %87 = vector.broadcast %84 : vector<8x1xf32> to vector<8x512xf32>
    %88 = arith.addf %86, %87 : vector<8x512xf32>
    %cst_28 = arith.constant 0.000000e+00 : f32
    %89 = vector.broadcast %cst_28 : f32 to vector<8x512xf32>
    %90 = arith.maximumf %88, %89 : vector<8x512xf32>
    %c8_29 = arith.constant 8 : index
    %c0_30 = arith.constant 0 : index
    %91 = vector.load %arg1[%c8_29, %c0_30] : memref<40x128xf32, #tpu.memory_space<vmem>>, vector<32x8xf32>
    %cst_31 = arith.constant dense<0.000000e+00> : vector<32x512xf32>
    %92 = tpu.matmul %91, %90, %cst_31 {dimension_numbers = #tpu.dot_dimension_numbers<[1], [0], [0], [1], [0, 0, 1, 1], [], []>} : vector<32x8xf32>, vector<8x512xf32>, vector<32x512xf32> -> vector<32x512xf32>
    %c8_32 = arith.constant 8 : index
    %c8_33 = arith.constant 8 : index
    %93 = vector.load %arg1[%c8_32, %c8_33] : memref<40x128xf32, #tpu.memory_space<vmem>>, vector<32x1xf32>
    %c8_34 = arith.constant 8 : index
    %c9 = arith.constant 9 : index
    %94 = vector.load %arg1[%c8_34, %c9] : memref<40x128xf32, #tpu.memory_space<vmem>>, vector<32x1xf32>
    %95 = arith.mulf %92, %92 : vector<32x512xf32>
    %96 = tpu.concatenate %92, %95 in 0 : vector<32x512xf32>, vector<32x512xf32> -> vector<64x512xf32>
    %cst_35 = arith.constant dense<0.000000e+00> : vector<64x128xf32>
    %97 = tpu.matmul %96, %1, %cst_35 {dimension_numbers = #tpu.dot_dimension_numbers<[1], [0], [0], [1], [0, 0, 1, 1], [], []>} : vector<64x512xf32>, vector<512x128xf32>, vector<64x128xf32> -> vector<64x128xf32>
    %98 = vector.extract_strided_slice %97 {offsets = [0, 0], sizes = [64, 1], strides = [1, 1]} : vector<64x128xf32> to vector<64x1xf32>
    %cst_36 = arith.constant 0.001953125 : f32
    %99 = vector.broadcast %cst_36 : f32 to vector<64x1xf32>
    %100 = arith.mulf %98, %99 : vector<64x1xf32>
    %101 = vector.extract_strided_slice %100 {offsets = [0, 0], sizes = [32, 1], strides = [1, 1]} : vector<64x1xf32> to vector<32x1xf32>
    %102 = vector.extract_strided_slice %100 {offsets = [32, 0], sizes = [32, 1], strides = [1, 1]} : vector<64x1xf32> to vector<32x1xf32>
    %103 = arith.mulf %101, %101 : vector<32x1xf32>
    %104 = arith.subf %102, %103 : vector<32x1xf32>
    %cst_37 = arith.constant 0.000000e+00 : f32
    %105 = vector.broadcast %cst_37 : f32 to vector<32x1xf32>
    %106 = arith.maximumf %104, %105 : vector<32x1xf32>
    %cst_38 = arith.constant 9.99999974E-6 : f32
    %107 = vector.broadcast %cst_38 : f32 to vector<32x1xf32>
    %108 = arith.addf %106, %107 : vector<32x1xf32>
    %109 = math.rsqrt %108 : vector<32x1xf32>
    %110 = arith.mulf %93, %109 : vector<32x1xf32>
    %111 = arith.mulf %101, %110 : vector<32x1xf32>
    %112 = arith.subf %94, %111 : vector<32x1xf32>
    %113 = vector.broadcast %110 : vector<32x1xf32> to vector<32x512xf32>
    %114 = arith.mulf %92, %113 : vector<32x512xf32>
    %115 = vector.broadcast %112 : vector<32x1xf32> to vector<32x512xf32>
    %116 = arith.addf %114, %115 : vector<32x512xf32>
    %117 = arith.addf %116, %0 : vector<32x512xf32>
    %cst_39 = arith.constant 0.000000e+00 : f32
    %118 = vector.broadcast %cst_39 : f32 to vector<32x512xf32>
    %119 = arith.maximumf %117, %118 : vector<32x512xf32>
    %c0_40 = arith.constant 0 : index
    %c0_41 = arith.constant 0 : index
    %120 = vector.load %arg3[%c0_40, %c0_41] : memref<32x512xf32, #tpu.memory_space<vmem>>, vector<32x512xf32>
    tpu.vector_store %arg3[%c0_40, %c0_41], %119 {strides = array<i32>} : memref<32x512xf32, #tpu.memory_space<vmem>>, vector<32x512xf32>,
    return
  }
}

</mosaic_0001>

<llo_original>
// kernel: bottleneck_forward.1
$region0: #{bottleneck_forward.1}
  #allocation0 [shape = 'u32[]', space=smem, size = 0x4, offset = 0x4, fixed_abs, tag = 'smem constant byte address 0x4 - core index']
  #allocation1 [shape = 'u32[72,128]{1,0:T(1,128)}', space=vmem, size = 0x9000, scoped, tag = 'internal scratch']
  %s0 = inlined_call_operand.vmem [shape: f32[32,512], index: 0, kind: input, shape index: {}]
  %s1 = inlined_call_operand.vmem [shape: f32[40,128], index: 1, kind: input, shape index: {}]
  %s2 = inlined_call_operand.vmem [shape: f32[9,512], index: 2, kind: input, shape index: {}]
  %s3 = inlined_call_operand.vmem [shape: f32[32,512], index: 3, kind: output, shape index: {}]
  %s4 = sld [smem:[#allocation0]]
  $region22: #{bottleneck_forward.1} parent=0
    _
  %s6 = ssub.s32 1, %s4
  %s7 = scalar_select 0, %s6, %s4
  // Predicated region
  $region2: #{bottleneck_forward.1} parent=0 // pred_check
    _
  $region3: #{bottleneck_forward.1} parent=0 // pred_check_branch
    %9 = sbr.rel (0) target = $region5
  $region4: #{bottleneck_forward.1} parent=0 // pred_region
    _
  $region5: #{bottleneck_forward.1} parent=0 // pred_fallthru
    _
  // Predicated region
  $region6: #{bottleneck_forward.1} parent=0 // pred_check
    _
  $region7: #{bottleneck_forward.1} parent=0 // pred_check_branch
    %11 = sbr.rel (0) target = $region9
  $region8: #{bottleneck_forward.1} parent=0 // pred_region
    _
  $region9: #{bottleneck_forward.1} parent=0 // pred_fallthru
    _
  // Predicated region
  $region10: #{bottleneck_forward.1} parent=0 // pred_check
    _
  $region11: #{bottleneck_forward.1} parent=0 // pred_check_branch
    %13 = sbr.rel (0) target = $region13
  $region12: #{bottleneck_forward.1} parent=0 // pred_region
    _
  $region13: #{bottleneck_forward.1} parent=0 // pred_fallthru
    _
  %v14 = vld [vmem:[%s0] sm:$0xff]
  %v15 = vld [vmem:[%s0 + $0x8] sm:$0xff]
  %v16 = vld [vmem:[%s0 + $0x10] sm:$0xff]
  %v17 = vld [vmem:[%s0 + $0x18] sm:$0xff]
  %v18 = vld [vmem:[%s0 + $0x20] sm:$0xff]
  %v19 = vld [vmem:[%s0 + $0x28] sm:$0xff]
  %v20 = vld [vmem:[%s0 + $0x30] sm:$0xff]
  %v21 = vld [vmem:[%s0 + $0x38] sm:$0xff]
  %v22 = vld [vmem:[%s0 + $0x40] sm:$0xff]
  %v23 = vld [vmem:[%s0 + $0x48] sm:$0xff]
  %v24 = vld [vmem:[%s0 + $0x50] sm:$0xff]
  %v25 = vld [vmem:[%s0 + $0x58] sm:$0xff]
  %v26 = vld [vmem:[%s0 + $0x60] sm:$0xff]
  %v27 = vld [vmem:[%s0 + $0x68] sm:$0xff]
  %v28 = vld [vmem:[%s0 + $0x70] sm:$0xff]
  %v29 = vld [vmem:[%s0 + $0x78] sm:$0xff]
  %v30 = vld [vmem:[%s1] sm:$0xff]
  %vm31 = vcmask 261120
  %v33 = vsel %vm31, %v30, 0
  %35 = vmatpush.msra.mxu0 0.0
  %36 = vmatpush.msra.mxu0 0.0
  %37 = vmatpush.msra.mxu0 0.0
  %38 = vmatpush.msra.mxu0 0.0
  %39 = vmatpush.msra.mxu0 0.0
  %40 = vmatpush.msra.mxu0 0.0
  %41 = vmatpush.msra.mxu0 0.0
  %42 = vmatpush.msra.mxu0 0.0
  %43 = vmatpush.msra.mxu0 0.0
  %44 = vmatpush.msra.mxu0 0.0
  %45 = vmatpush.msra.mxu0 0.0
  %46 = vmatpush.msra.mxu0 0.0
  %47 = vmatpush.msra.mxu0 %v26
  %48 = vmatpush.msra.mxu0 %v22
  %49 = vmatpush.msra.mxu0 %v18
  %50 = vmatpush.msra.mxu0 %v14
  %51 = vmatmul.f32.gmra.mxu0 %v33
  %v52 = vpop.f32.mrf.mxu0
  %v53 = vadd.f32 0.0, %v52
  %54 = vdwg.mxu0
  %55 = vmatpush.msra.mxu0 0.0
  %56 = vmatpush.msra.mxu0 0.0
  %57 = vmatpush.msra.mxu0 0.0
  %58 = vmatpush.msra.mxu0 0.0
  %59 = vmatpush.msra.mxu0 0.0
  %60 = vmatpush.msra.mxu0 0.0
  %61 = vmatpush.msra.mxu0 0.0
  %62 = vmatpush.msra.mxu0 0.0
  %63 = vmatpush.msra.mxu0 0.0
  %64 = vmatpush.msra.mxu0 0.0
  %65 = vmatpush.msra.mxu0 0.0
  %66 = vmatpush.msra.mxu0 0.0
  %67 = vmatpush.msra.mxu0 %v27
  %68 = vmatpush.msra.mxu0 %v23
  %69 = vmatpush.msra.mxu0 %v19
  %70 = vmatpush.msra.mxu0 %v15
  %71 = vmatmul.f32.gmra.mxu0 %v33
  %v72 = vpop.f32.mrf.mxu0
  %v73 = vadd.f32 0.0, %v72
  %74 = vdwg.mxu0
  %75 = vmatpush.msra.mxu0 0.0
  %76 = vmatpush.msra.mxu0 0.0
  %77 = vmatpush.msra.mxu0 0.0
  %78 = vmatpush.msra.mxu0 0.0
  %79 = vmatpush.msra.mxu0 0.0
  %80 = vmatpush.msra.mxu0 0.0
  %81 = vmatpush.msra.mxu0 0.0
  %82 = vmatpush.msra.mxu0 0.0
  %83 = vmatpush.msra.mxu0 0.0
  %84 = vmatpush.msra.mxu0 0.0
  %85 = vmatpush.msra.mxu0 0.0
  %86 = vmatpush.msra.mxu0 0.0
  %87 = vmatpush.msra.mxu0 %v28
  %88 = vmatpush.msra.mxu0 %v24
  %89 = vmatpush.msra.mxu0 %v20
  %90 = vmatpush.msra.mxu0 %v16
  %91 = vmatmul.f32.gmra.mxu0 %v33
  %v92 = vpop.f32.mrf.mxu0
  %v93 = vadd.f32 0.0, %v92
  %94 = vdwg.mxu0
  %95 = vmatpush.msra.mxu0 0.0
  %96 = vmatpush.msra.mxu0 0.0
  %97 = vmatpush.msra.mxu0 0.0
  %98 = vmatpush.msra.mxu0 0.0
  %99 = vmatpush.msra.mxu0 0.0
  %100 = vmatpush.msra.mxu0 0.0
  %101 = vmatpush.msra.mxu0 0.0
  %102 = vmatpush.msra.mxu0 0.0
  %103 = vmatpush.msra.mxu0 0.0
  %104 = vmatpush.msra.mxu0 0.0
  %105 = vmatpush.msra.mxu0 0.0
  %106 = vmatpush.msra.mxu0 0.0
  %107 = vmatpush.msra.mxu0 %v29
  %108 = vmatpush.msra.mxu0 %v25
  %109 = vmatpush.msra.mxu0 %v21
  %110 = vmatpush.msra.mxu0 %v17
  %111 = vmatmul.f32.gmra.mxu0 %v33
  %v112 = vpop.f32.mrf.mxu0
  %v113 = vadd.f32 0.0, %v112
  %114 = vdwg.mxu0
  %v115 = vmul.f32 %v53, %v53
  %v116 = vmul.f32 %v73, %v73
  %v117 = vmul.f32 %v93, %v93
  %v118 = vmul.f32 %v113, %v113
  %119 = vmatpush.msra.mxu0 1.0
  %120 = vmatpush.msra.mxu0 1.0
  %121 = vmatpush.msra.mxu0 1.0
  %122 = vmatpush.msra.mxu0 1.0
  %123 = vmatpush.msra.mxu0 1.0
  %124 = vmatpush.msra.mxu0 1.0
  %125 = vmatpush.msra.mxu0 1.0
  %126 = vmatpush.msra.mxu0 1.0
  %127 = vmatpush.msra.mxu0 1.0
  %128 = vmatpush.msra.mxu0 1.0
  %129 = vmatpush.msra.mxu0 1.0
  %130 = vmatpush.msra.mxu0 1.0
  %131 = vmatpush.msra.mxu0 1.0
  %132 = vmatpush.msra.mxu0 1.0
  %133 = vmatpush.msra.mxu0 1.0
  %134 = vmatpush.msra.mxu0 1.0
  %135 = vmatmul.f32.gmra.mxu0 %v53
  %v136 = vpop.f32.mrf.mxu0
  %v137 = vadd.f32 0.0, %v136
  %138 = vmatmul.f32.gmra.mxu0 %v115
  %v139 = vpop.f32.mrf.mxu0
  %v140 = vadd.f32 0.0, %v139
  %141 = vdwg.mxu0
  %142 = vmatpush.msra.mxu0 1.0
  %143 = vmatpush.msra.mxu0 1.0
  %144 = vmatpush.msra.mxu0 1.0
  %145 = vmatpush.msra.mxu0 1.0
  %146 = vmatpush.msra.mxu0 1.0
  %147 = vmatpush.msra.mxu0 1.0
  %148 = vmatpush.msra.mxu0 1.0
  %149 = vmatpush.msra.mxu0 1.0
  %150 = vmatpush.msra.mxu0 1.0
  %151 = vmatpush.msra.mxu0 1.0
  %152 = vmatpush.msra.mxu0 1.0
  %153 = vmatpush.msra.mxu0 1.0
  %154 = vmatpush.msra.mxu0 1.0
  %155 = vmatpush.msra.mxu0 1.0
  %156 = vmatpush.msra.mxu0 1.0
  %157 = vmatpush.msra.mxu0 1.0
  %158 = vmatmul.f32.gmra.mxu0 %v73
  %v159 = vpop.f32.mrf.mxu0
  %v160 = vadd.f32 %v137, %v159
  %161 = vmatmul.f32.gmra.mxu0 %v116
  %v162 = vpop.f32.mrf.mxu0
  %v163 = vadd.f32 %v140, %v162
  %164 = vdwg.mxu0
  %165 = vmatpush.msra.mxu0 1.0
  %166 = vmatpush.msra.mxu0 1.0
  %167 = vmatpush.msra.mxu0 1.0
  %168 = vmatpush.msra.mxu0 1.0
  %169 = vmatpush.msra.mxu0 1.0
  %170 = vmatpush.msra.mxu0 1.0
  %171 = vmatpush.msra.mxu0 1.0
  %172 = vmatpush.msra.mxu0 1.0
  %173 = vmatpush.msra.mxu0 1.0
  %174 = vmatpush.msra.mxu0 1.0
  %175 = vmatpush.msra.mxu0 1.0
  %176 = vmatpush.msra.mxu0 1.0
  %177 = vmatpush.msra.mxu0 1.0
  %178 = vmatpush.msra.mxu0 1.0
  %179 = vmatpush.msra.mxu0 1.0
  %180 = vmatpush.msra.mxu0 1.0
  %181 = vmatmul.f32.gmra.mxu0 %v93
  %v182 = vpop.f32.mrf.mxu0
  %v183 = vadd.f32 %v160, %v182
  %184 = vmatmul.f32.gmra.mxu0 %v117
  %v185 = vpop.f32.mrf.mxu0
  %v186 = vadd.f32 %v163, %v185
  %187 = vdwg.mxu0
  %188 = vmatpush.msra.mxu0 1.0
  %189 = vmatpush.msra.mxu0 1.0
  %190 = vmatpush.msra.mxu0 1.0
  %191 = vmatpush.msra.mxu0 1.0
  %192 = vmatpush.msra.mxu0 1.0
  %193 = vmatpush.msra.mxu0 1.0
  %194 = vmatpush.msra.mxu0 1.0
  %195 = vmatpush.msra.mxu0 1.0
  %196 = vmatpush.msra.mxu0 1.0
  %197 = vmatpush.msra.mxu0 1.0
  %198 = vmatpush.msra.mxu0 1.0
  %199 = vmatpush.msra.mxu0 1.0
  %200 = vmatpush.msra.mxu0 1.0
  %201 = vmatpush.msra.mxu0 1.0
  %202 = vmatpush.msra.mxu0 1.0
  %203 = vmatpush.msra.mxu0 1.0
  %204 = vmatmul.f32.gmra.mxu0 %v113
  %v205 = vpop.f32.mrf.mxu0
  %v206 = vadd.f32 %v183, %v205
  %207 = vmatmul.f32.gmra.mxu0 %v118
  %v208 = vpop.f32.mrf.mxu0
  %v209 = vadd.f32 %v186, %v208
  %210 = vdwg.mxu0
  %v211 = vmul.f32 %v206, 0.001953125
  %v212 = vmul.f32 %v209, 0.001953125
  %v213 = vmul.f32 %v211, %v211
  %v214 = vsub.f32 %v212, %v213
  %v215 = vmax.f32 %v214, 0.0
  %v216 = vadd.f32 %v215, 1e-05
  %v217 = vrsqrt.pop %v216
  %v218 = vmul.f32 %v217, %v216
  %v219 = vmul.f32 %v218, %v217
  %v220 = vmul.f32 0.5, %v219
  %v221 = vsub.f32 1.5, %v220
  %v222 = vmul.f32 %v217, %v221
  %vm223 = vweird.f32 %v216
  %vm224 = vweird.f32 %v217
  %vm225 = vmor %vm223, %vm224
  %v226 = vsel %vm225, %v217, %v222
  %228 = vrot.lane.b32.xlu0 %v226, 104
  %v229 = vpop.permute.xlu0 %228
  %v231 = vmul.f32 %v30, %v229
  %233 = vrot.lane.b32.xlu0 %v231, 24
  %v234 = vpop.permute.xlu0 %233
  %v236 = vmul.f32 %v211, %v234
  %238 = vrot.lane.b32.xlu0 %v236, 105
  %v239 = vpop.permute.xlu0 %238
  %v241 = vsub.f32 %v30, %v239
  %242 = vset.pattern.permute.xlu0 104
  %243 = vperm.xlu0 %242, %v231
  %v244 = vpop.permute.xlu0 %243
  %v246 = vmul.f32 %v53, %v244
  %v247 = vmul.f32 %v73, %v244
  %v248 = vmul.f32 %v93, %v244
  %v249 = vmul.f32 %v113, %v244
  %251 = vset.pattern.permute.xlu0 105
  %252 = vperm.xlu0 %251, %v241
  %v253 = vpop.permute.xlu0 %252
  %v255 = vadd.f32 %v246, %v253
  %v256 = vadd.f32 %v247, %v253
  %v257 = vadd.f32 %v248, %v253
  %v258 = vadd.f32 %v249, %v253
  %v259 = vmax.f32 %v255, 0.0
  %v260 = vmax.f32 %v256, 0.0
  %v261 = vmax.f32 %v257, 0.0
  %v262 = vmax.f32 %v258, 0.0
  %263 = vrot.lane.b32.xlu0 %v259, 17
  %v264 = vpop.permute.xlu0 %263
  %265 = vrot.lane.b32.xlu0 %v260, 17
  %v266 = vpop.permute.xlu0 %265
  %267 = vrot.lane.b32.xlu0 %v261, 17
  %v268 = vpop.permute.xlu0 %267
  %269 = vrot.lane.b32.xlu0 %v262, 17
  %v270 = vpop.permute.xlu0 %269
  %v271 = vlaneseq
  %v272 = vand.u32 %v271, 127
  %vm273 = vcmp.lt.s32.totalorder %v272, 17
  %v274 = vsel %vm273, %v268, %v270
  %v275 = vsel %vm273, %v266, %v268
  %v276 = vsel %vm273, %v264, %v266
  %v277 = vsel %vm273, %v270, %v264
  %v278 = vld [vmem:[%s2] ss:$8 sm:$0xf]
  %v280 = vperm.slane %v278, 0
  %v281 = vperm.slane %v278, 1
  %v282 = vperm.slane %v278, 2
  %v283 = vperm.slane %v278, 3
  %v288 = vmul.f32 %v277, %v280
  %v289 = vmul.f32 %v276, %v281
  %v290 = vmul.f32 %v275, %v282
  %v291 = vmul.f32 %v274, %v283
  %292 = vrot.lane.b32.xlu0 %v259, 16
  %v293 = vpop.permute.xlu0 %292
  %294 = vrot.lane.b32.xlu0 %v260, 16
  %v295 = vpop.permute.xlu0 %294
  %296 = vrot.lane.b32.xlu0 %v261, 16
  %v297 = vpop.permute.xlu0 %296
  %298 = vrot.lane.b32.xlu0 %v262, 16
  %v299 = vpop.permute.xlu0 %298
  %vm300 = vcmp.lt.s32.totalorder %v272, 16
  %v301 = vsel %vm300, %v297, %v299
  %v302 = vsel %vm300, %v295, %v297
  %v303 = vsel %vm300, %v293, %v295
  %v304 = vsel %vm300, %v299, %v293
  %s305 = scalar_lea.vmem %s2, 1
  %v306 = vld [vmem:[%s305] ss:$8 sm:$0xf]
  %v308 = vperm.slane %v306, 0
  %v309 = vperm.slane %v306, 1
  %v310 = vperm.slane %v306, 2
  %v311 = vperm.slane %v306, 3
  %v316 = vmul.f32 %v304, %v308
  %v317 = vmul.f32 %v303, %v309
  %v318 = vmul.f32 %v302, %v310
  %v319 = vmul.f32 %v301, %v311
  %320 = vrot.lane.b32.xlu0 %v259, 15
  %v321 = vpop.permute.xlu0 %320
  %322 = vrot.lane.b32.xlu0 %v260, 15
  %v323 = vpop.permute.xlu0 %322
  %324 = vrot.lane.b32.xlu0 %v261, 15
  %v325 = vpop.permute.xlu0 %324
  %326 = vrot.lane.b32.xlu0 %v262, 15
  %v327 = vpop.permute.xlu0 %326
  %vm328 = vcmp.lt.s32.totalorder %v272, 15
  %v329 = vsel %vm328, %v325, %v327
  %v330 = vsel %vm328, %v323, %v325
  %v331 = vsel %vm328, %v321, %v323
  %v332 = vsel %vm328, %v327, %v321
  %s333 = scalar_lea.vmem %s2, 2
  %v334 = vld [vmem:[%s333] ss:$8 sm:$0xf]
  %v336 = vperm.slane %v334, 0
  %v337 = vperm.slane %v334, 1
  %v338 = vperm.slane %v334, 2
  %v339 = vperm.slane %v334, 3
  %v344 = vmul.f32 %v332, %v336
  %v345 = vmul.f32 %v331, %v337
  %v346 = vmul.f32 %v330, %v338
  %v347 = vmul.f32 %v329, %v339
  %348 = vrot.lane.b32.xlu0 %v259, 1
  %v349 = vpop.permute.xlu0 %348
  %350 = vrot.lane.b32.xlu0 %v260, 1
  %v351 = vpop.permute.xlu0 %350
  %352 = vrot.lane.b32.xlu0 %v261, 1
  %v353 = vpop.permute.xlu0 %352
  %354 = vrot.lane.b32.xlu0 %v262, 1
  %v355 = vpop.permute.xlu0 %354
  %vm356 = vcmp.lt.s32.totalorder %v272, 1
  %v357 = vsel %vm356, %v353, %v355
  %v358 = vsel %vm356, %v351, %v353
  %v359 = vsel %vm356, %v349, %v351
  %v360 = vsel %vm356, %v355, %v349
  %s361 = scalar_lea.vmem %s2, 3
  %v362 = vld [vmem:[%s361] ss:$8 sm:$0xf]
  %v364 = vperm.slane %v362, 0
  %v365 = vperm.slane %v362, 1
  %v366 = vperm.slane %v362, 2
  %v367 = vperm.slane %v362, 3
  %v372 = vmul.f32 %v360, %v364
  %v373 = vmul.f32 %v359, %v365
  %v374 = vmul.f32 %v358, %v366
  %v375 = vmul.f32 %v357, %v367
  %376 = vrot.lane.b32.xlu0 %v259, 127
  %v377 = vpop.permute.xlu0 %376
  %378 = vrot.lane.b32.xlu0 %v260, 127
  %v379 = vpop.permute.xlu0 %378
  %380 = vrot.lane.b32.xlu0 %v261, 127
  %v381 = vpop.permute.xlu0 %380
  %382 = vrot.lane.b32.xlu0 %v262, 127
  %v383 = vpop.permute.xlu0 %382
  %vm384 = vcmp.lt.s32.totalorder %v272, 127
  %v385 = vsel %vm384, %v381, %v383
  %v386 = vsel %vm384, %v379, %v381
  %v387 = vsel %vm384, %v377, %v379
  %v388 = vsel %vm384, %v383, %v377
  %s389 = scalar_lea.vmem %s2, 5
  %v390 = vld [vmem:[%s389] ss:$8 sm:$0xf]
  %v392 = vperm.slane %v390, 0
  %v393 = vperm.slane %v390, 1
  %v394 = vperm.slane %v390, 2
  %v395 = vperm.slane %v390, 3
  %v400 = vmul.f32 %v387, %v392
  %v401 = vmul.f32 %v386, %v393
  %v402 = vmul.f32 %v385, %v394
  %v403 = vmul.f32 %v388, %v395
  %404 = vrot.lane.b32.xlu0 %v259, 113
  %v405 = vpop.permute.xlu0 %404
  %406 = vrot.lane.b32.xlu0 %v260, 113
  %v407 = vpop.permute.xlu0 %406
  %408 = vrot.lane.b32.xlu0 %v261, 113
  %v409 = vpop.permute.xlu0 %408
  %410 = vrot.lane.b32.xlu0 %v262, 113
  %v411 = vpop.permute.xlu0 %410
  %vm412 = vcmp.lt.s32.totalorder %v272, 113
  %v413 = vsel %vm412, %v409, %v411
  %v414 = vsel %vm412, %v407, %v409
  %v415 = vsel %vm412, %v405, %v407
  %v416 = vsel %vm412, %v411, %v405
  %s417 = scalar_lea.vmem %s2, 6
  %v418 = vld [vmem:[%s417] ss:$8 sm:$0xf]
  %v420 = vperm.slane %v418, 0
  %v421 = vperm.slane %v418, 1
  %v422 = vperm.slane %v418, 2
  %v423 = vperm.slane %v418, 3
  %v428 = vmul.f32 %v415, %v420
  %v429 = vmul.f32 %v414, %v421
  %v430 = vmul.f32 %v413, %v422
  %v431 = vmul.f32 %v416, %v423
  %432 = vrot.lane.b32.xlu0 %v259, 112
  %v433 = vpop.permute.xlu0 %432
  %434 = vrot.lane.b32.xlu0 %v260, 112
  %v435 = vpop.permute.xlu0 %434
  %436 = vrot.lane.b32.xlu0 %v261, 112
  %v437 = vpop.permute.xlu0 %436
  %438 = vrot.lane.b32.xlu0 %v262, 112
  %v439 = vpop.permute.xlu0 %438
  %vm440 = vcmp.lt.s32.totalorder %v272, 112
  %v441 = vsel %vm440, %v437, %v439
  %v442 = vsel %vm440, %v435, %v437
  %v443 = vsel %vm440, %v433, %v435
  %v444 = vsel %vm440, %v439, %v433
  %s445 = scalar_lea.vmem %s2, 7
  %v446 = vld [vmem:[%s445] ss:$8 sm:$0xf]
  %v448 = vperm.slane %v446, 0
  %v449 = vperm.slane %v446, 1
  %v450 = vperm.slane %v446, 2
  %v451 = vperm.slane %v446, 3
  %v456 = vmul.f32 %v443, %v448
  %v457 = vmul.f32 %v442, %v449
  %v458 = vmul.f32 %v441, %v450
  %v459 = vmul.f32 %v444, %v451
  %460 = vrot.lane.b32.xlu0 %v259, 111
  %v461 = vpop.permute.xlu0 %460
  %462 = vrot.lane.b32.xlu0 %v260, 111
  %v463 = vpop.permute.xlu0 %462
  %464 = vrot.lane.b32.xlu0 %v261, 111
  %v465 = vpop.permute.xlu0 %464
  %466 = vrot.lane.b32.xlu0 %v262, 111
  %v467 = vpop.permute.xlu0 %466
  %vm468 = vcmp.lt.s32.totalorder %v272, 111
  %v469 = vsel %vm468, %v465, %v467
  %v470 = vsel %vm468, %v463, %v465
  %v471 = vsel %vm468, %v461, %v463
  %v472 = vsel %vm468, %v467, %v461
  %s473 = scalar_lea.vmem %s2, 32
  %v474 = vld [vmem:[%s473] ss:$8 sm:$0xf]
  %v476 = vperm.slane %v474, 0
  %v477 = vperm.slane %v474, 1
  %v478 = vperm.slane %v474, 2
  %v479 = vperm.slane %v474, 3
  %v484 = vmul.f32 %v471, %v476
  %v485 = vmul.f32 %v470, %v477
  %v486 = vmul.f32 %v469, %v478
  %v487 = vmul.f32 %v472, %v479
  %488 = vrot.lane.b32.xlu0 %v30, 96
  %v489 = vpop.permute.xlu0 %488
  %vm490 = vcmask 588800
  %v491 = vsel %vm490, %v489, 0
  %493 = vmatpush.msra.mxu0 0.0
  %494 = vmatpush.msra.mxu0 0.0
  %495 = vmatpush.msra.mxu0 0.0
  %496 = vmatpush.msra.mxu0 0.0
  %497 = vmatpush.msra.mxu0 0.0
  %498 = vmatpush.msra.mxu0 0.0
  %499 = vmatpush.msra.mxu0 0.0
  %500 = vmatpush.msra.mxu0 %v484
  %501 = vmatpush.msra.mxu0 %v456
  %502 = vmatpush.msra.mxu0 %v428
  %503 = vmatpush.msra.mxu0 %v400
  %504 = vmatpush.msra.mxu0 %v259
  %505 = vmatpush.msra.mxu0 %v372
  %506 = vmatpush.msra.mxu0 %v344
  %507 = vmatpush.msra.mxu0 %v316
  %508 = vmatpush.msra.mxu0 %v288
  %509 = vmatmul.f32.gmra.mxu0 %v491
  %v510 = vpop.f32.mrf.mxu0
  %v511 = vadd.f32 0.0, %v510
  %512 = vdwg.mxu0
  %513 = vmatpush.msra.mxu0 0.0
  %514 = vmatpush.msra.mxu0 0.0
  %515 = vmatpush.msra.mxu0 0.0
  %516 = vmatpush.msra.mxu0 0.0
  %517 = vmatpush.msra.mxu0 0.0
  %518 = vmatpush.msra.mxu0 0.0
  %519 = vmatpush.msra.mxu0 0.0
  %520 = vmatpush.msra.mxu0 %v485
  %521 = vmatpush.msra.mxu0 %v457
  %522 = vmatpush.msra.mxu0 %v429
  %523 = vmatpush.msra.mxu0 %v401
  %524 = vmatpush.msra.mxu0 %v260
  %525 = vmatpush.msra.mxu0 %v373
  %526 = vmatpush.msra.mxu0 %v345
  %527 = vmatpush.msra.mxu0 %v317
  %528 = vmatpush.msra.mxu0 %v289
  %529 = vmatmul.f32.gmra.mxu0 %v491
  %v530 = vpop.f32.mrf.mxu0
  %v531 = vadd.f32 0.0, %v530
  %532 = vdwg.mxu0
  %533 = vmatpush.msra.mxu0 0.0
  %534 = vmatpush.msra.mxu0 0.0
  %535 = vmatpush.msra.mxu0 0.0
  %536 = vmatpush.msra.mxu0 0.0
  %537 = vmatpush.msra.mxu0 0.0
  %538 = vmatpush.msra.mxu0 0.0
  %539 = vmatpush.msra.mxu0 0.0
  %540 = vmatpush.msra.mxu0 %v486
  %541 = vmatpush.msra.mxu0 %v458
  %542 = vmatpush.msra.mxu0 %v430
  %543 = vmatpush.msra.mxu0 %v402
  %544 = vmatpush.msra.mxu0 %v261
  %545 = vmatpush.msra.mxu0 %v374
  %546 = vmatpush.msra.mxu0 %v346
  %547 = vmatpush.msra.mxu0 %v318
  %548 = vmatpush.msra.mxu0 %v290
  %549 = vmatmul.f32.gmra.mxu0 %v491
  %v550 = vpop.f32.mrf.mxu0
  %v551 = vadd.f32 0.0, %v550
  %552 = vdwg.mxu0
  %553 = vmatpush.msra.mxu0 0.0
  %554 = vmatpush.msra.mxu0 0.0
  %555 = vmatpush.msra.mxu0 0.0
  %556 = vmatpush.msra.mxu0 0.0
  %557 = vmatpush.msra.mxu0 0.0
  %558 = vmatpush.msra.mxu0 0.0
  %559 = vmatpush.msra.mxu0 0.0
  %560 = vmatpush.msra.mxu0 %v487
  %561 = vmatpush.msra.mxu0 %v459
  %562 = vmatpush.msra.mxu0 %v431
  %563 = vmatpush.msra.mxu0 %v403
  %564 = vmatpush.msra.mxu0 %v262
  %565 = vmatpush.msra.mxu0 %v375
  %566 = vmatpush.msra.mxu0 %v347
  %567 = vmatpush.msra.mxu0 %v319
  %568 = vmatpush.msra.mxu0 %v291
  %569 = vmatmul.f32.gmra.mxu0 %v491
  %v570 = vpop.f32.mrf.mxu0
  %v571 = vadd.f32 0.0, %v570
  %572 = vdwg.mxu0
  %v573 = vmul.f32 %v511, %v511
  %v574 = vmul.f32 %v531, %v531
  %v575 = vmul.f32 %v551, %v551
  %v576 = vmul.f32 %v571, %v571
  %577 = vmatpush.msra.mxu0 1.0
  %578 = vmatpush.msra.mxu0 1.0
  %579 = vmatpush.msra.mxu0 1.0
  %580 = vmatpush.msra.mxu0 1.0
  %581 = vmatpush.msra.mxu0 1.0
  %582 = vmatpush.msra.mxu0 1.0
  %583 = vmatpush.msra.mxu0 1.0
  %584 = vmatpush.msra.mxu0 1.0
  %585 = vmatpush.msra.mxu0 1.0
  %586 = vmatpush.msra.mxu0 1.0
  %587 = vmatpush.msra.mxu0 1.0
  %588 = vmatpush.msra.mxu0 1.0
  %589 = vmatpush.msra.mxu0 1.0
  %590 = vmatpush.msra.mxu0 1.0
  %591 = vmatpush.msra.mxu0 1.0
  %592 = vmatpush.msra.mxu0 1.0
  %593 = vmatmul.f32.gmra.mxu0 %v511
  %v594 = vpop.f32.mrf.mxu0
  %v595 = vadd.f32 0.0, %v594
  %596 = vmatmul.f32.gmra.mxu0 %v573
  %v597 = vpop.f32.mrf.mxu0
  %v598 = vadd.f32 0.0, %v597
  %599 = vdwg.mxu0
  %600 = vmatpush.msra.mxu0 1.0
  %601 = vmatpush.msra.mxu0 1.0
  %602 = vmatpush.msra.mxu0 1.0
  %603 = vmatpush.msra.mxu0 1.0
  %604 = vmatpush.msra.mxu0 1.0
  %605 = vmatpush.msra.mxu0 1.0
  %606 = vmatpush.msra.mxu0 1.0
  %607 = vmatpush.msra.mxu0 1.0
  %608 = vmatpush.msra.mxu0 1.0
  %609 = vmatpush.msra.mxu0 1.0
  %610 = vmatpush.msra.mxu0 1.0
  %611 = vmatpush.msra.mxu0 1.0
  %612 = vmatpush.msra.mxu0 1.0
  %613 = vmatpush.msra.mxu0 1.0
  %614 = vmatpush.msra.mxu0 1.0
  %615 = vmatpush.msra.mxu0 1.0
  %616 = vmatmul.f32.gmra.mxu0 %v531
  %v617 = vpop.f32.mrf.mxu0
  %v618 = vadd.f32 %v595, %v617
  %619 = vmatmul.f32.gmra.mxu0 %v574
  %v620 = vpop.f32.mrf.mxu0
  %v621 = vadd.f32 %v598, %v620
  %622 = vdwg.mxu0
  %623 = vmatpush.msra.mxu0 1.0
  %624 = vmatpush.msra.mxu0 1.0
  %625 = vmatpush.msra.mxu0 1.0
  %626 = vmatpush.msra.mxu0 1.0
  %627 = vmatpush.msra.mxu0 1.0
  %628 = vmatpush.msra.mxu0 1.0
  %629 = vmatpush.msra.mxu0 1.0
  %630 = vmatpush.msra.mxu0 1.0
  %631 = vmatpush.msra.mxu0 1.0
  %632 = vmatpush.msra.mxu0 1.0
  %633 = vmatpush.msra.mxu0 1.0
  %634 = vmatpush.msra.mxu0 1.0
  %635 = vmatpush.msra.mxu0 1.0
  %636 = vmatpush.msra.mxu0 1.0
  %637 = vmatpush.msra.mxu0 1.0
  %638 = vmatpush.msra.mxu0 1.0
  %639 = vmatmul.f32.gmra.mxu0 %v551
  %v640 = vpop.f32.mrf.mxu0
  %v641 = vadd.f32 %v618, %v640
  %642 = vmatmul.f32.gmra.mxu0 %v575
  %v643 = vpop.f32.mrf.mxu0
  %v644 = vadd.f32 %v621, %v643
  %645 = vdwg.mxu0
  %646 = vmatpush.msra.mxu0 1.0
  %647 = vmatpush.msra.mxu0 1.0
  %648 = vmatpush.msra.mxu0 1.0
  %649 = vmatpush.msra.mxu0 1.0
  %650 = vmatpush.msra.mxu0 1.0
  %651 = vmatpush.msra.mxu0 1.0
  %652 = vmatpush.msra.mxu0 1.0
  %653 = vmatpush.msra.mxu0 1.0
  %654 = vmatpush.msra.mxu0 1.0
  %655 = vmatpush.msra.mxu0 1.0
  %656 = vmatpush.msra.mxu0 1.0
  %657 = vmatpush.msra.mxu0 1.0
  %658 = vmatpush.msra.mxu0 1.0
  %659 = vmatpush.msra.mxu0 1.0
  %660 = vmatpush.msra.mxu0 1.0
  %661 = vmatpush.msra.mxu0 1.0
  %662 = vmatmul.f32.gmra.mxu0 %v571
  %v663 = vpop.f32.mrf.mxu0
  %v664 = vadd.f32 %v641, %v663
  %665 = vmatmul.f32.gmra.mxu0 %v576
  %v666 = vpop.f32.mrf.mxu0
  %v667 = vadd.f32 %v644, %v666
  %668 = vdwg.mxu0
  %v669 = vmul.f32 %v664, 0.001953125
  %v670 = vmul.f32 %v667, 0.001953125
  %v671 = vmul.f32 %v669, %v669
  %v672 = vsub.f32 %v670, %v671
  %v673 = vmax.f32 %v672, 0.0
  %v674 = vadd.f32 %v673, 1e-05
  %v675 = vrsqrt.pop %v674
  %v676 = vmul.f32 %v675, %v674
  %v677 = vmul.f32 %v676, %v675
  %v678 = vmul.f32 0.5, %v677
  %v679 = vsub.f32 1.5, %v678
  %v680 = vmul.f32 %v675, %v679
  %vm681 = vweird.f32 %v674
  %vm682 = vweird.f32 %v675
  %vm683 = vmor %vm681, %vm682
  %v684 = vsel %vm683, %v675, %v680
  %686 = vrot.lane.b32.xlu0 %v684, 106
  %v687 = vpop.permute.xlu0 %686
  %v689 = vmul.f32 %v30, %v687
  %691 = vrot.lane.b32.xlu0 %v689, 22
  %v692 = vpop.permute.xlu0 %691
  %v694 = vmul.f32 %v669, %v692
  %696 = vrot.lane.b32.xlu0 %v694, 107
  %v697 = vpop.permute.xlu0 %696
  %v699 = vsub.f32 %v30, %v697
  %700 = vset.pattern.permute.xlu0 106
  %701 = vperm.xlu0 %700, %v689
  %v702 = vpop.permute.xlu0 %701
  %v704 = vmul.f32 %v511, %v702
  %v705 = vmul.f32 %v531, %v702
  %v706 = vmul.f32 %v551, %v702
  %v707 = vmul.f32 %v571, %v702
  %709 = vset.pattern.permute.xlu0 107
  %710 = vperm.xlu0 %709, %v699
  %v711 = vpop.permute.xlu0 %710
  %v713 = vadd.f32 %v704, %v711
  %v714 = vadd.f32 %v705, %v711
  %v715 = vadd.f32 %v706, %v711
  %v716 = vadd.f32 %v707, %v711
  %v717 = vmax.f32 %v713, 0.0
  %v718 = vmax.f32 %v714, 0.0
  %v719 = vmax.f32 %v715, 0.0
  %v720 = vmax.f32 %v716, 0.0
  %v721 = vld [vmem:[%s1 + $0x8] sm:$0xff]
  %v722 = vld [vmem:[%s1 + $0x10] sm:$0xff]
  %v723 = vld [vmem:[%s1 + $0x18] sm:$0xff]
  %v724 = vld [vmem:[%s1 + $0x20] sm:$0xff]
  %vm725 = vcmask 64512
  %v727 = vsel %vm725, %v721, 0
  %v730 = vsel %vm725, %v722, 0
  %v733 = vsel %vm725, %v723, 0
  %v736 = vsel %vm725, %v724, 0
  %738 = vmatpush.msra.mxu0 0.0
  %739 = vmatpush.msra.mxu0 0.0
  %740 = vmatpush.msra.mxu0 0.0
  %741 = vmatpush.msra.mxu0 0.0
  %742 = vmatpush.msra.mxu0 0.0
  %743 = vmatpush.msra.mxu0 0.0
  %744 = vmatpush.msra.mxu0 0.0
  %745 = vmatpush.msra.mxu0 0.0
  %746 = vmatpush.msra.mxu0 0.0
  %747 = vmatpush.msra.mxu0 0.0
  %748 = vmatpush.msra.mxu0 0.0
  %749 = vmatpush.msra.mxu0 0.0
  %750 = vmatpush.msra.mxu0 0.0
  %751 = vmatpush.msra.mxu0 0.0
  %752 = vmatpush.msra.mxu0 0.0
  %753 = vmatpush.msra.mxu0 %v717
  %754 = vmatmul.f32.gmra.mxu0 %v727
  %v755 = vpop.f32.mrf.mxu0
  %v756 = vadd.f32 0.0, %v755
  %757 = vmatmul.f32.gmra.mxu0 %v730
  %v758 = vpop.f32.mrf.mxu0
  %v759 = vadd.f32 0.0, %v758
  %760 = vmatmul.f32.gmra.mxu0 %v733
  %v761 = vpop.f32.mrf.mxu0
  %v762 = vadd.f32 0.0, %v761
  %763 = vmatmul.f32.gmra.mxu0 %v736
  %v764 = vpop.f32.mrf.mxu0
  %v765 = vadd.f32 0.0, %v764
  %766 = vdwg.mxu0
  %767 = vmatpush.msra.mxu0 0.0
  %768 = vmatpush.msra.mxu0 0.0
  %769 = vmatpush.msra.mxu0 0.0
  %770 = vmatpush.msra.mxu0 0.0
  %771 = vmatpush.msra.mxu0 0.0
  %772 = vmatpush.msra.mxu0 0.0
  %773 = vmatpush.msra.mxu0 0.0
  %774 = vmatpush.msra.mxu0 0.0
  %775 = vmatpush.msra.mxu0 0.0
  %776 = vmatpush.msra.mxu0 0.0
  %777 = vmatpush.msra.mxu0 0.0
  %778 = vmatpush.msra.mxu0 0.0
  %779 = vmatpush.msra.mxu0 0.0
  %780 = vmatpush.msra.mxu0 0.0
  %781 = vmatpush.msra.mxu0 0.0
  %782 = vmatpush.msra.mxu0 %v718
  %783 = vmatmul.f32.gmra.mxu0 %v727
  %v784 = vpop.f32.mrf.mxu0
  %v785 = vadd.f32 0.0, %v784
  %786 = vmatmul.f32.gmra.mxu0 %v730
  %v787 = vpop.f32.mrf.mxu0
  %v788 = vadd.f32 0.0, %v787
  %789 = vmatmul.f32.gmra.mxu0 %v733
  %v790 = vpop.f32.mrf.mxu0
  %v791 = vadd.f32 0.0, %v790
  %792 = vmatmul.f32.gmra.mxu0 %v736
  %v793 = vpop.f32.mrf.mxu0
  %v794 = vadd.f32 0.0, %v793
  %795 = vdwg.mxu0
  %796 = vmatpush.msra.mxu0 0.0
  %797 = vmatpush.msra.mxu0 0.0
  %798 = vmatpush.msra.mxu0 0.0
  %799 = vmatpush.msra.mxu0 0.0
  %800 = vmatpush.msra.mxu0 0.0
  %801 = vmatpush.msra.mxu0 0.0
  %802 = vmatpush.msra.mxu0 0.0
  %803 = vmatpush.msra.mxu0 0.0
  %804 = vmatpush.msra.mxu0 0.0
  %805 = vmatpush.msra.mxu0 0.0
  %806 = vmatpush.msra.mxu0 0.0
  %807 = vmatpush.msra.mxu0 0.0
  %808 = vmatpush.msra.mxu0 0.0
  %809 = vmatpush.msra.mxu0 0.0
  %810 = vmatpush.msra.mxu0 0.0
  %811 = vmatpush.msra.mxu0 %v719
  %812 = vmatmul.f32.gmra.mxu0 %v727
  %v813 = vpop.f32.mrf.mxu0
  %v814 = vadd.f32 0.0, %v813
  %815 = vmatmul.f32.gmra.mxu0 %v730
  %v816 = vpop.f32.mrf.mxu0
  %v817 = vadd.f32 0.0, %v816
  %818 = vmatmul.f32.gmra.mxu0 %v733
  %v819 = vpop.f32.mrf.mxu0
  %v820 = vadd.f32 0.0, %v819
  %821 = vmatmul.f32.gmra.mxu0 %v736
  %v822 = vpop.f32.mrf.mxu0
  %v823 = vadd.f32 0.0, %v822
  %824 = vdwg.mxu0
  %825 = vmatpush.msra.mxu0 0.0
  %826 = vmatpush.msra.mxu0 0.0
  %827 = vmatpush.msra.mxu0 0.0
  %828 = vmatpush.msra.mxu0 0.0
  %829 = vmatpush.msra.mxu0 0.0
  %830 = vmatpush.msra.mxu0 0.0
  %831 = vmatpush.msra.mxu0 0.0
  %832 = vmatpush.msra.mxu0 0.0
  %833 = vmatpush.msra.mxu0 0.0
  %834 = vmatpush.msra.mxu0 0.0
  %835 = vmatpush.msra.mxu0 0.0
  %836 = vmatpush.msra.mxu0 0.0
  %837 = vmatpush.msra.mxu0 0.0
  %838 = vmatpush.msra.mxu0 0.0
  %839 = vmatpush.msra.mxu0 0.0
  %840 = vmatpush.msra.mxu0 %v720
  %841 = vmatmul.f32.gmra.mxu0 %v727
  %v842 = vpop.f32.mrf.mxu0
  %v843 = vadd.f32 0.0, %v842
  %844 = vmatmul.f32.gmra.mxu0 %v730
  %v845 = vpop.f32.mrf.mxu0
  %v846 = vadd.f32 0.0, %v845
  %847 = vmatmul.f32.gmra.mxu0 %v733
  %v848 = vpop.f32.mrf.mxu0
  %v849 = vadd.f32 0.0, %v848
  %850 = vmatmul.f32.gmra.mxu0 %v736
  %v851 = vpop.f32.mrf.mxu0
  %v852 = vadd.f32 0.0, %v851
  %853 = vdwg.mxu0
  %v854 = vmul.f32 %v756, %v756
  %v855 = vmul.f32 %v785, %v785
  %v856 = vmul.f32 %v814, %v814
  %v857 = vmul.f32 %v843, %v843
  %v858 = vmul.f32 %v759, %v759
  %v859 = vmul.f32 %v788, %v788
  %v860 = vmul.f32 %v817, %v817
  %v861 = vmul.f32 %v846, %v846
  %v862 = vmul.f32 %v762, %v762
  %v863 = vmul.f32 %v791, %v791
  %v864 = vmul.f32 %v820, %v820
  %v865 = vmul.f32 %v849, %v849
  %v866 = vmul.f32 %v765, %v765
  %v867 = vmul.f32 %v794, %v794
  %v868 = vmul.f32 %v823, %v823
  %v869 = vmul.f32 %v852, %v852
  %870 = vmatpush.msra.mxu0 1.0
  %871 = vmatpush.msra.mxu0 1.0
  %872 = vmatpush.msra.mxu0 1.0
  %873 = vmatpush.msra.mxu0 1.0
  %874 = vmatpush.msra.mxu0 1.0
  %875 = vmatpush.msra.mxu0 1.0
  %876 = vmatpush.msra.mxu0 1.0
  %877 = vmatpush.msra.mxu0 1.0
  %878 = vmatpush.msra.mxu0 1.0
  %879 = vmatpush.msra.mxu0 1.0
  %880 = vmatpush.msra.mxu0 1.0
  %881 = vmatpush.msra.mxu0 1.0
  %882 = vmatpush.msra.mxu0 1.0
  %883 = vmatpush.msra.mxu0 1.0
  %884 = vmatpush.msra.mxu0 1.0
  %885 = vmatpush.msra.mxu0 1.0
  %886 = vmatmul.f32.gmra.mxu0 %v756
  %v887 = vpop.f32.mrf.mxu0
  %v888 = vadd.f32 0.0, %v887
  %889 = vmatmul.f32.gmra.mxu0 %v759
  %v890 = vpop.f32.mrf.mxu0
  %v891 = vadd.f32 0.0, %v890
  %892 = vmatmul.f32.gmra.mxu0 %v762
  %v893 = vpop.f32.mrf.mxu0
  %v894 = vadd.f32 0.0, %v893
  %895 = vmatmul.f32.gmra.mxu0 %v765
  %v896 = vpop.f32.mrf.mxu0
  %v897 = vadd.f32 0.0, %v896
  %898 = vmatmul.f32.gmra.mxu0 %v854
  %v899 = vpop.f32.mrf.mxu0
  %v900 = vadd.f32 0.0, %v899
  %901 = vmatmul.f32.gmra.mxu0 %v858
  %v902 = vpop.f32.mrf.mxu0
  %v903 = vadd.f32 0.0, %v902
  %904 = vmatmul.f32.gmra.mxu0 %v862
  %v905 = vpop.f32.mrf.mxu0
  %v906 = vadd.f32 0.0, %v905
  %907 = vmatmul.f32.gmra.mxu0 %v866
  %v908 = vpop.f32.mrf.mxu0
  %v909 = vadd.f32 0.0, %v908
  %910 = vdwg.mxu0
  %911 = vmatpush.msra.mxu0 1.0
  %912 = vmatpush.msra.mxu0 1.0
  %913 = vmatpush.msra.mxu0 1.0
  %914 = vmatpush.msra.mxu0 1.0
  %915 = vmatpush.msra.mxu0 1.0
  %916 = vmatpush.msra.mxu0 1.0
  %917 = vmatpush.msra.mxu0 1.0
  %918 = vmatpush.msra.mxu0 1.0
  %919 = vmatpush.msra.mxu0 1.0
  %920 = vmatpush.msra.mxu0 1.0
  %921 = vmatpush.msra.mxu0 1.0
  %922 = vmatpush.msra.mxu0 1.0
  %923 = vmatpush.msra.mxu0 1.0
  %924 = vmatpush.msra.mxu0 1.0
  %925 = vmatpush.msra.mxu0 1.0
  %926 = vmatpush.msra.mxu0 1.0
  %927 = vmatmul.f32.gmra.mxu0 %v785
  %v928 = vpop.f32.mrf.mxu0
  %v929 = vadd.f32 %v888, %v928
  %930 = vmatmul.f32.gmra.mxu0 %v788
  %v931 = vpop.f32.mrf.mxu0
  %v932 = vadd.f32 %v891, %v931
  %933 = vmatmul.f32.gmra.mxu0 %v791
  %v934 = vpop.f32.mrf.mxu0
  %v935 = vadd.f32 %v894, %v934
  %936 = vmatmul.f32.gmra.mxu0 %v794
  %v937 = vpop.f32.mrf.mxu0
  %v938 = vadd.f32 %v897, %v937
  %939 = vmatmul.f32.gmra.mxu0 %v855
  %v940 = vpop.f32.mrf.mxu0
  %v941 = vadd.f32 %v900, %v940
  %942 = vmatmul.f32.gmra.mxu0 %v859
  %v943 = vpop.f32.mrf.mxu0
  %v944 = vadd.f32 %v903, %v943
  %945 = vmatmul.f32.gmra.mxu0 %v863
  %v946 = vpop.f32.mrf.mxu0
  %v947 = vadd.f32 %v906, %v946
  %948 = vmatmul.f32.gmra.mxu0 %v867
  %v949 = vpop.f32.mrf.mxu0
  %v950 = vadd.f32 %v909, %v949
  %951 = vdwg.mxu0
  %952 = vmatpush.msra.mxu0 1.0
  %953 = vmatpush.msra.mxu0 1.0
  %954 = vmatpush.msra.mxu0 1.0
  %955 = vmatpush.msra.mxu0 1.0
  %956 = vmatpush.msra.mxu0 1.0
  %957 = vmatpush.msra.mxu0 1.0
  %958 = vmatpush.msra.mxu0 1.0
  %959 = vmatpush.msra.mxu0 1.0
  %960 = vmatpush.msra.mxu0 1.0
  %961 = vmatpush.msra.mxu0 1.0
  %962 = vmatpush.msra.mxu0 1.0
  %963 = vmatpush.msra.mxu0 1.0
  %964 = vmatpush.msra.mxu0 1.0
  %965 = vmatpush.msra.mxu0 1.0
  %966 = vmatpush.msra.mxu0 1.0
  %967 = vmatpush.msra.mxu0 1.0
  %968 = vmatmul.f32.gmra.mxu0 %v814
  %v969 = vpop.f32.mrf.mxu0
  %v970 = vadd.f32 %v929, %v969
  %971 = vmatmul.f32.gmra.mxu0 %v817
  %v972 = vpop.f32.mrf.mxu0
  %v973 = vadd.f32 %v932, %v972
  %974 = vmatmul.f32.gmra.mxu0 %v820
  %v975 = vpop.f32.mrf.mxu0
  %v976 = vadd.f32 %v935, %v975
  %977 = vmatmul.f32.gmra.mxu0 %v823
  %v978 = vpop.f32.mrf.mxu0
  %v979 = vadd.f32 %v938, %v978
  %980 = vmatmul.f32.gmra.mxu0 %v856
  %v981 = vpop.f32.mrf.mxu0
  %v982 = vadd.f32 %v941, %v981
  %983 = vmatmul.f32.gmra.mxu0 %v860
  %v984 = vpop.f32.mrf.mxu0
  %v985 = vadd.f32 %v944, %v984
  %986 = vmatmul.f32.gmra.mxu0 %v864
  %v987 = vpop.f32.mrf.mxu0
  %v988 = vadd.f32 %v947, %v987
  %989 = vmatmul.f32.gmra.mxu0 %v868
  %v990 = vpop.f32.mrf.mxu0
  %v991 = vadd.f32 %v950, %v990
  %992 = vdwg.mxu0
  %993 = vmatpush.msra.mxu0 1.0
  %994 = vmatpush.msra.mxu0 1.0
  %995 = vmatpush.msra.mxu0 1.0
  %996 = vmatpush.msra.mxu0 1.0
  %997 = vmatpush.msra.mxu0 1.0
  %998 = vmatpush.msra.mxu0 1.0
  %999 = vmatpush.msra.mxu0 1.0
  %1000 = vmatpush.msra.mxu0 1.0
  %1001 = vmatpush.msra.mxu0 1.0
  %1002 = vmatpush.msra.mxu0 1.0
  %1003 = vmatpush.msra.mxu0 1.0
  %1004 = vmatpush.msra.mxu0 1.0
  %1005 = vmatpush.msra.mxu0 1.0
  %1006 = vmatpush.msra.mxu0 1.0
  %1007 = vmatpush.msra.mxu0 1.0
  %1008 = vmatpush.msra.mxu0 1.0
  %1009 = vmatmul.f32.gmra.mxu0 %v843
  %v1010 = vpop.f32.mrf.mxu0
  %v1011 = vadd.f32 %v970, %v1010
  %1012 = vmatmul.f32.gmra.mxu0 %v846
  %v1013 = vpop.f32.mrf.mxu0
  %v1014 = vadd.f32 %v973, %v1013
  %1015 = vmatmul.f32.gmra.mxu0 %v849
  %v1016 = vpop.f32.mrf.mxu0
  %v1017 = vadd.f32 %v976, %v1016
  %1018 = vmatmul.f32.gmra.mxu0 %v852
  %v1019 = vpop.f32.mrf.mxu0
  %v1020 = vadd.f32 %v979, %v1019
  %1021 = vmatmul.f32.gmra.mxu0 %v857
  %v1022 = vpop.f32.mrf.mxu0
  %v1023 = vadd.f32 %v982, %v1022
  %1024 = vmatmul.f32.gmra.mxu0 %v861
  %v1025 = vpop.f32.mrf.mxu0
  %v1026 = vadd.f32 %v985, %v1025
  %1027 = vmatmul.f32.gmra.mxu0 %v865
  %v1028 = vpop.f32.mrf.mxu0
  %v1029 = vadd.f32 %v988, %v1028
  %1030 = vmatmul.f32.gmra.mxu0 %v869
  %v1031 = vpop.f32.mrf.mxu0
  %v1032 = vadd.f32 %v991, %v1031
  %1033 = vdwg.mxu0
  %v1034 = vmul.f32 %v1011, 0.001953125
  %v1035 = vmul.f32 %v1014, 0.001953125
  %v1036 = vmul.f32 %v1017, 0.001953125
  %v1037 = vmul.f32 %v1020, 0.001953125
  %v1038 = vmul.f32 %v1023, 0.001953125
  %v1039 = vmul.f32 %v1026, 0.001953125
  %v1040 = vmul.f32 %v1029, 0.001953125
  %v1041 = vmul.f32 %v1032, 0.001953125
  %v1042 = vmul.f32 %v1034, %v1034
  %v1043 = vmul.f32 %v1035, %v1035
  %v1044 = vmul.f32 %v1036, %v1036
  %v1045 = vmul.f32 %v1037, %v1037
  %v1046 = vsub.f32 %v1038, %v1042
  %v1047 = vsub.f32 %v1039, %v1043
  %v1048 = vsub.f32 %v1040, %v1044
  %v1049 = vsub.f32 %v1041, %v1045
  %v1050 = vmax.f32 %v1046, 0.0
  %v1051 = vmax.f32 %v1047, 0.0
  %v1052 = vmax.f32 %v1048, 0.0
  %v1053 = vmax.f32 %v1049, 0.0
  %v1054 = vadd.f32 %v1050, 1e-05
  %v1055 = vadd.f32 %v1051, 1e-05
  %v1056 = vadd.f32 %v1052, 1e-05
  %v1057 = vadd.f32 %v1053, 1e-05
  %v1058 = vrsqrt.pop %v1054
  %v1059 = vmul.f32 %v1058, %v1054
  %v1060 = vmul.f32 %v1059, %v1058
  %v1061 = vmul.f32 0.5, %v1060
  %v1062 = vsub.f32 1.5, %v1061
  %v1063 = vmul.f32 %v1058, %v1062
  %vm1064 = vweird.f32 %v1054
  %vm1065 = vweird.f32 %v1058
  %vm1066 = vmor %vm1064, %vm1065
  %v1067 = vsel %vm1066, %v1058, %v1063
  %v1068 = vrsqrt.pop %v1055
  %v1069 = vmul.f32 %v1068, %v1055
  %v1070 = vmul.f32 %v1069, %v1068
  %v1071 = vmul.f32 0.5, %v1070
  %v1072 = vsub.f32 1.5, %v1071
  %v1073 = vmul.f32 %v1068, %v1072
  %vm1074 = vweird.f32 %v1055
  %vm1075 = vweird.f32 %v1068
  %vm1076 = vmor %vm1074, %vm1075
  %v1077 = vsel %vm1076, %v1068, %v1073
  %v1078 = vrsqrt.pop %v1056
  %v1079 = vmul.f32 %v1078, %v1056
  %v1080 = vmul.f32 %v1079, %v1078
  %v1081 = vmul.f32 0.5, %v1080
  %v1082 = vsub.f32 1.5, %v1081
  %v1083 = vmul.f32 %v1078, %v1082
  %vm1084 = vweird.f32 %v1056
  %vm1085 = vweird.f32 %v1078
  %vm1086 = vmor %vm1084, %vm1085
  %v1087 = vsel %vm1086, %v1078, %v1083
  %v1088 = vrsqrt.pop %v1057
  %v1089 = vmul.f32 %v1088, %v1057
  %v1090 = vmul.f32 %v1089, %v1088
  %v1091 = vmul.f32 0.5, %v1090
  %v1092 = vsub.f32 1.5, %v1091
  %v1093 = vmul.f32 %v1088, %v1092
  %vm1094 = vweird.f32 %v1057
  %vm1095 = vweird.f32 %v1088
  %vm1096 = vmor %vm1094, %vm1095
  %v1097 = vsel %vm1096, %v1088, %v1093
  %1102 = vrot.lane.b32.xlu0 %v1067, 8
  %v1103 = vpop.permute.xlu0 %1102
  %1104 = vrot.lane.b32.xlu0 %v1077, 8
  %v1105 = vpop.permute.xlu0 %1104
  %1106 = vrot.lane.b32.xlu0 %v1087, 8
  %v1107 = vpop.permute.xlu0 %1106
  %1108 = vrot.lane.b32.xlu0 %v1097, 8
  %v1109 = vpop.permute.xlu0 %1108
  %v1114 = vmul.f32 %v721, %v1103
  %v1115 = vmul.f32 %v722, %v1105
  %v1116 = vmul.f32 %v723, %v1107
  %v1117 = vmul.f32 %v724, %v1109
  %1122 = vrot.lane.b32.xlu0 %v1114, 120
  %v1123 = vpop.permute.xlu0 %1122
  %1124 = vrot.lane.b32.xlu0 %v1115, 120
  %v1125 = vpop.permute.xlu0 %1124
  %1126 = vrot.lane.b32.xlu0 %v1116, 120
  %v1127 = vpop.permute.xlu0 %1126
  %1128 = vrot.lane.b32.xlu0 %v1117, 120
  %v1129 = vpop.permute.xlu0 %1128
  %v1134 = vmul.f32 %v1034, %v1123
  %v1135 = vmul.f32 %v1035, %v1125
  %v1136 = vmul.f32 %v1036, %v1127
  %v1137 = vmul.f32 %v1037, %v1129
  %1142 = vrot.lane.b32.xlu0 %v1134, 9
  %v1143 = vpop.permute.xlu0 %1142
  %1144 = vrot.lane.b32.xlu0 %v1135, 9
  %v1145 = vpop.permute.xlu0 %1144
  %1146 = vrot.lane.b32.xlu0 %v1136, 9
  %v1147 = vpop.permute.xlu0 %1146
  %1148 = vrot.lane.b32.xlu0 %v1137, 9
  %v1149 = vpop.permute.xlu0 %1148
  %v1154 = vsub.f32 %v721, %v1143
  %v1155 = vsub.f32 %v722, %v1145
  %v1156 = vsub.f32 %v723, %v1147
  %v1157 = vsub.f32 %v724, %v1149
  %1158 = vset.pattern.permute.xlu0 8
  %1159 = vperm.xlu0 %1158, %v1114
  %v1160 = vpop.permute.xlu0 %1159
  %1162 = vset.pattern.permute.xlu0 8
  %1163 = vperm.xlu0 %1162, %v1115
  %v1164 = vpop.permute.xlu0 %1163
  %1166 = vset.pattern.permute.xlu0 8
  %1167 = vperm.xlu0 %1166, %v1116
  %v1168 = vpop.permute.xlu0 %1167
  %1170 = vset.pattern.permute.xlu0 8
  %1171 = vperm.xlu0 %1170, %v1117
  %v1172 = vpop.permute.xlu0 %1171
  %v1174 = vmul.f32 %v756, %v1160
  %v1175 = vmul.f32 %v785, %v1160
  %v1176 = vmul.f32 %v814, %v1160
  %v1177 = vmul.f32 %v843, %v1160
  %v1178 = vmul.f32 %v759, %v1164
  %v1179 = vmul.f32 %v788, %v1164
  %v1180 = vmul.f32 %v817, %v1164
  %v1181 = vmul.f32 %v846, %v1164
  %v1182 = vmul.f32 %v762, %v1168
  %v1183 = vmul.f32 %v791, %v1168
  %v1184 = vmul.f32 %v820, %v1168
  %v1185 = vmul.f32 %v849, %v1168
  %v1186 = vmul.f32 %v765, %v1172
  %v1187 = vmul.f32 %v794, %v1172
  %v1188 = vmul.f32 %v823, %v1172
  %v1189 = vmul.f32 %v852, %v1172
  %1191 = vset.pattern.permute.xlu0 9
  %1192 = vperm.xlu0 %1191, %v1154
  %v1193 = vpop.permute.xlu0 %1192
  %1196 = vset.pattern.permute.xlu0 9
  %1197 = vperm.xlu0 %1196, %v1155
  %v1198 = vpop.permute.xlu0 %1197
  %1201 = vset.pattern.permute.xlu0 9
  %1202 = vperm.xlu0 %1201, %v1156
  %v1203 = vpop.permute.xlu0 %1202
  %1206 = vset.pattern.permute.xlu0 9
  %1207 = vperm.xlu0 %1206, %v1157
  %v1208 = vpop.permute.xlu0 %1207
  %v1210 = vadd.f32 %v1174, %v1193
  %v1211 = vadd.f32 %v1175, %v1193
  %v1212 = vadd.f32 %v1176, %v1193
  %v1213 = vadd.f32 %v1177, %v1193
  %v1214 = vadd.f32 %v1178, %v1198
  %v1215 = vadd.f32 %v1179, %v1198
  %v1216 = vadd.f32 %v1180, %v1198
  %v1217 = vadd.f32 %v1181, %v1198
  %v1218 = vadd.f32 %v1182, %v1203
  %v1219 = vadd.f32 %v1183, %v1203
  %v1220 = vadd.f32 %v1184, %v1203
  %v1221 = vadd.f32 %v1185, %v1203
  %v1222 = vadd.f32 %v1186, %v1208
  %v1223 = vadd.f32 %v1187, %v1208
  %v1224 = vadd.f32 %v1188, %v1208
  %v1225 = vadd.f32 %v1189, %v1208
  %v1226 = vadd.f32 %v1210, %v14
  %v1227 = vadd.f32 %v1211, %v15
  %v1228 = vadd.f32 %v1212, %v16
  %v1229 = vadd.f32 %v1213, %v17
  %v1230 = vadd.f32 %v1214, %v18
  %v1231 = vadd.f32 %v1215, %v19
  %v1232 = vadd.f32 %v1216, %v20
  %v1233 = vadd.f32 %v1217, %v21
  %v1234 = vadd.f32 %v1218, %v22
  %v1235 = vadd.f32 %v1219, %v23
  %v1236 = vadd.f32 %v1220, %v24
  %v1237 = vadd.f32 %v1221, %v25
  %v1238 = vadd.f32 %v1222, %v26
  %v1239 = vadd.f32 %v1223, %v27
  %v1240 = vadd.f32 %v1224, %v28
  %v1241 = vadd.f32 %v1225, %v29
  %v1242 = vmax.f32 %v1226, 0.0
  %v1243 = vmax.f32 %v1227, 0.0
  %v1244 = vmax.f32 %v1228, 0.0
  %v1245 = vmax.f32 %v1229, 0.0
  %v1246 = vmax.f32 %v1230, 0.0
  %v1247 = vmax.f32 %v1231, 0.0
  %v1248 = vmax.f32 %v1232, 0.0
  %v1249 = vmax.f32 %v1233, 0.0
  %v1250 = vmax.f32 %v1234, 0.0
  %v1251 = vmax.f32 %v1235, 0.0
  %v1252 = vmax.f32 %v1236, 0.0
  %v1253 = vmax.f32 %v1237, 0.0
  %v1254 = vmax.f32 %v1238, 0.0
  %v1255 = vmax.f32 %v1239, 0.0
  %v1256 = vmax.f32 %v1240, 0.0
  %v1257 = vmax.f32 %v1241, 0.0
  %1258 = vst [vmem:[%s3] sm:$0xff] %v1242
  %1259 = vst [vmem:[%s3 + $0x8] sm:$0xff] %v1243
  %1260 = vst [vmem:[%s3 + $0x10] sm:$0xff] %v1244
  %1261 = vst [vmem:[%s3 + $0x18] sm:$0xff] %v1245
  %1262 = vst [vmem:[%s3 + $0x20] sm:$0xff] %v1246
  %1263 = vst [vmem:[%s3 + $0x28] sm:$0xff] %v1247
  %1264 = vst [vmem:[%s3 + $0x30] sm:$0xff] %v1248
  %1265 = vst [vmem:[%s3 + $0x38] sm:$0xff] %v1249
  %1266 = vst [vmem:[%s3 + $0x40] sm:$0xff] %v1250
  %1267 = vst [vmem:[%s3 + $0x48] sm:$0xff] %v1251
  %1268 = vst [vmem:[%s3 + $0x50] sm:$0xff] %v1252
  %1269 = vst [vmem:[%s3 + $0x58] sm:$0xff] %v1253
  %1270 = vst [vmem:[%s3 + $0x60] sm:$0xff] %v1254
  %1271 = vst [vmem:[%s3 + $0x68] sm:$0xff] %v1255
  %1272 = vst [vmem:[%s3 + $0x70] sm:$0xff] %v1256
  %1273 = vst [vmem:[%s3 + $0x78] sm:$0xff] %v1257
  // Predicated region
  $region14: #{bottleneck_forward.1} parent=0 // pred_check
    _
  $region15: #{bottleneck_forward.1} parent=0 // pred_check_branch
    %1275 = sbr.rel (0) target = $region17
  $region16: #{bottleneck_forward.1} parent=0 // pred_region
    _
  $region17: #{bottleneck_forward.1} parent=0 // pred_fallthru
    _
  // Predicated region
  $region18: #{bottleneck_forward.1} parent=0 // pred_check
    _
  $region19: #{bottleneck_forward.1} parent=0 // pred_check_branch
    %1277 = sbr.rel (0) target = $region21
  $region20: #{bottleneck_forward.1} parent=0 // pred_region
    _
  $region21: #{bottleneck_forward.1} parent=0 // pred_fallthru
    _

</llo_original>
